<compile_context>
chip_gen: v5e
topology: v5e:2x2
jax: 0.10.0
libtpu: 0.0.40
codegen_flags: <defaults>
</compile_context>

<pallas_src>
import functools

import jax
import jax.numpy as jnp
from jax import lax
from jax.experimental import pallas as pl
from jax.experimental.pallas import tpu as pltpu

# Finite "-inf" sentinel.  Must be a plain Python float: a jnp scalar here was
# captured as a kernel constant and broke tracing.
_NEG = -1e30


def _round_up(x, m):
    return (x + m - 1) // m * m


def _cdiv(a, b):
    return -(-a // b)


def _to_col(v_row, nb):
    """[1, B] -> [B, 1] without a transpose (diag mask + lane reduction)."""
    eye = (lax.broadcasted_iota(jnp.int32, (nb, nb), 0) ==
           lax.broadcasted_iota(jnp.int32, (nb, nb), 1)).astype(v_row.dtype)
    return jnp.sum(eye * v_row, axis=1, keepdims=True)


def _ain_stats_kernel(feats_ref, w_ref, bias_ref, bidc_ref, bidr_ref,
                      istd_ref, shift_ref,
                      m_sc, e_sc, a_sc, xs_sc, x2_sc, *, nbp):
    tm = feats_ref.shape[0]
    hp = lax.Precision.HIGHEST

    @pl.when(pl.program_id(0) == 0)
    def _init():
        m_sc[...] = jnp.full_like(m_sc, _NEG)
        e_sc[...] = jnp.zeros_like(e_sc)
        a_sc[...] = jnp.zeros_like(a_sc)
        xs_sc[...] = jnp.zeros_like(xs_sc)
        x2_sc[...] = jnp.zeros_like(x2_sc)

    # Zero-mask rows belonging to no batch (ragged tail of the last tile);
    # this also neutralizes any garbage read past N (feats is unpadded).
    bid_c = bidc_ref[...]                                           # [TM, 1]
    valid = bid_c >= 0
    xf = jnp.where(valid, feats_ref[...].astype(jnp.float32), 0.0)  # [TM, F]

    # Fused dual projection on the MXU (cols 0/1 hold w_local / w_global).
    proj = jnp.dot(xf, w_ref[...], preferred_element_type=jnp.float32,
                   precision=hp)                                    # [TM, 2]
    local_w = proj[:, 0:1] + bias_ref[0]                            # [TM, 1]
    global_w = proj[:, 1:2] + bias_ref[1]                           # [TM, 1]

    # Batch one-hots in both orientations (cheap integer compares; bid=-1 and
    # padded batch slots match nothing).
    onehot = (bid_c == lax.broadcasted_iota(jnp.int32, (tm, nbp), 1)
              ).astype(jnp.float32)                                 # [TM, B]
    onehot_t = (bidr_ref[...] == lax.broadcasted_iota(jnp.int32, (nbp, tm), 0)
                ).astype(jnp.float32)                               # [B, TM]

    # Online per-batch softmax statistics (running max + rescale).
    g_masked = jnp.where(onehot > 0.0, global_w, _NEG)              # [TM, B]
    tile_max = jnp.max(g_masked, axis=0, keepdims=True)             # [1, B]
    m_old = m_sc[...]
    m_new = jnp.maximum(m_old, tile_max)                            # [1, B]
    alpha = jnp.exp(m_old - m_new)                                  # [1, B]
    alpha_col = _to_col(alpha, nbp)                                 # [B, 1]

    row_m = jnp.sum(onehot * m_new, axis=1, keepdims=True)          # [TM, 1]
    p = jnp.exp(global_w - row_m)                                   # [TM, 1]
    w_row = jax.nn.sigmoid(local_w) * p                             # [TM, 1]

    e_add = jnp.sum(onehot * p, axis=0, keepdims=True)              # [1, B]
    a_add = jnp.sum(onehot * w_row, axis=0, keepdims=True)          # [1, B]

    # Per-batch weighted feature sums on the MXU: [B,TM] @ [TM,F] -> [B,F].
    wx = w_row * xf
    wx2 = wx * xf
    xs_add = jnp.dot(onehot_t, wx, preferred_element_type=jnp.float32,
                     precision=hp)
    x2_add = jnp.dot(onehot_t, wx2, preferred_element_type=jnp.float32,
                     precision=hp)

    m_sc[...] = m_new
    e_sc[...] = alpha * e_sc[...] + e_add
    a_sc[...] = alpha * a_sc[...] + a_add
    xs_sc[...] = alpha_col * xs_sc[...] + xs_add
    x2_sc[...] = alpha_col * x2_sc[...] + x2_add

    @pl.when(pl.program_id(0) == pl.num_programs(0) - 1)
    def _finalize():
        e = e_sc[...]                                               # [1, B]
        inv_e = jnp.where(e > 0.0, 1.0 / e, 0.0)
        inv_e_col = _to_col(inv_e, nbp)                             # [B, 1]
        total_w = jnp.sum(a_sc[...] * inv_e)                        # = sum(|weight|)
        inv_t = 1.0 / total_w
        sx = jnp.sum(xs_sc[...] * inv_e_col, axis=0, keepdims=True)   # [1, F]
        sxx = jnp.sum(x2_sc[...] * inv_e_col, axis=0, keepdims=True)  # [1, F]
        mean = sx * inv_t
        # Clamp: E[x^2] - mean^2 can go slightly negative in f32.  No epsilon,
        # to stay faithful to the PyTorch module (divide by std).
        var = jnp.maximum(sxx * inv_t - mean * mean, 0.0)
        istd = lax.rsqrt(var)
        istd_ref[...] = istd
        shift_ref[...] = -mean * istd


def _ain_norm_kernel(feats_ref, istd_ref, shift_ref, out_ref):
    x = feats_ref[...].astype(jnp.float32)
    out_ref[...] = (x * istd_ref[...] + shift_ref[...]).astype(out_ref.dtype)


@functools.partial(jax.jit, static_argnums=(6, 7))
def ain_forward(feats, batch_ids, w_local, b_local, w_global, b_global,
                num_batches, block_rows=2048):
    n, f = feats.shape
    nbp = _round_up(max(int(num_batches), 1), 8)   # pad batch axis to sublanes
    f32 = jnp.float32
    itemsize = jnp.dtype(feats.dtype).itemsize
    f_lane = _round_up(f, 128)

    # ---- stats pass tile: multiple of 128 unless the whole array fits one tile.
    # Rough per-row VMEM: f32 temps (x, wx, wx2) + double-buffered native input
    # + a handful of lane-padded [TM,1]/[TM,B] temporaries.
    per_row = f_lane * (3 * 4 + 2 * itemsize) + 8 * 512
    cap = max(128, (24 * 1024 * 1024 // per_row) // 128 * 128)
    tm = max(128, (min(int(block_rows), cap) // 128) * 128)
    if _round_up(n, 8) <= tm:
        tm = _round_up(n, 8)
    n_tiles = _cdiv(n, tm)
    n_pad = n_tiles * tm

    # Only the tiny batch-id arrays are padded; feats is fed unpadded, in its
    # model dtype, and the ragged tail is masked in-kernel (bid -1 = no batch).
    bid = batch_ids.reshape(n).astype(jnp.int32)
    bid_col = jnp.full((n_pad, 1), -1, jnp.int32).at[:n, 0].set(bid)
    bid_row = jnp.full((1, n_pad), -1, jnp.int32).at[0, :n].set(bid)

    # Both 1-unit projections stacked into one [F, 2] weight (cols: local, global).
    w_stack = jnp.stack([w_local.reshape(f).astype(f32),
                         w_global.reshape(f).astype(f32)], axis=1)
    bias = jnp.concatenate([b_local.reshape(1), b_global.reshape(1)]).astype(f32)

    vmem_cap = 48 * 1024 * 1024   # <= ~48 MiB so the same config also fits v7x

    istd_row, shift_row = pl.pallas_call(
        functools.partial(_ain_stats_kernel, nbp=nbp),
        out_shape=(jax.ShapeDtypeStruct((1, f), f32),
                   jax.ShapeDtypeStruct((1, f), f32)),
        grid=(n_tiles,),
        in_specs=[
            pl.BlockSpec((tm, f), lambda i: (i, 0)),             # feats tile
            pl.BlockSpec((f, 2), lambda i: (0, 0)),              # stacked weights
            pl.BlockSpec(memory_space=pltpu.MemorySpace.SMEM),   # [b_local, b_global]
            pl.BlockSpec((tm, 1), lambda i: (i, 0)),             # batch ids (sublane)
            pl.BlockSpec((1, tm), lambda i: (0, i)),             # batch ids (lane)
        ],
        out_specs=(pl.BlockSpec((1, f), lambda i: (0, 0)),
                   pl.BlockSpec((1, f), lambda i: (0, 0))),
        scratch_shapes=[
            pltpu.VMEM((1, nbp), f32),    # running per-batch max
            pltpu.VMEM((1, nbp), f32),    # per-batch sum exp
            pltpu.VMEM((1, nbp), f32),    # per-batch sum sigmoid*exp
            pltpu.VMEM((nbp, f), f32),    # per-batch sum w*x
            pltpu.VMEM((nbp, f), f32),    # per-batch sum w*x^2
        ],
        compiler_params=pltpu.CompilerParams(
            dimension_semantics=("arbitrary",),
            vmem_limit_bytes=vmem_cap),
    )(feats, w_stack, bias, bid_col, bid_row)

    # ---- normalize pass: only two streams (in + out), so it gets its own tile.
    per_row2 = f_lane * itemsize * 4 + 256
    cap2 = max(128, (24 * 1024 * 1024 // per_row2) // 128 * 128)
    tm2 = cap2
    if _round_up(n, 8) <= tm2:
        tm2 = _round_up(n, 8)
    n_tiles2 = _cdiv(n, tm2)

    out = pl.pallas_call(
        _ain_norm_kernel,
        out_shape=jax.ShapeDtypeStruct((n, f), feats.dtype),
        grid=(n_tiles2,),
        in_specs=[
            pl.BlockSpec((tm2, f), lambda i: (i, 0)),
            pl.BlockSpec((1, f), lambda i: (0, 0)),
            pl.BlockSpec((1, f), lambda i: (0, 0)),
        ],
        out_specs=pl.BlockSpec((tm2, f), lambda i: (i, 0)),
        compiler_params=pltpu.CompilerParams(
            dimension_semantics=("parallel",),
            vmem_limit_bytes=vmem_cap),
    )(feats, istd_row, shift_row)

    return out


def ain_reference(feats, batch_ids, w_local, b_local, w_global, b_global,
                  num_batches):
    """Pure-JAX f32 reference mirroring the PyTorch per-batch loop."""
    feats = feats.astype(jnp.float32)
    hp = jax.lax.Precision.HIGHEST
    local_w = jnp.dot(feats, w_local.reshape(-1, 1), precision=hp) \
        + b_local.reshape(1, 1)
    global_w = jnp.dot(feats, w_global.reshape(-1, 1), precision=hp) \
        + b_global.reshape(1, 1)
    sig = jax.nn.sigmoid(local_w)
    weight = jnp.zeros_like(local_w)
    for b in range(num_batches):
        mask = (batch_ids.reshape(-1, 1) == b)
        g = jnp.where(mask, global_w, -jnp.inf)
        g = g - jnp.max(g, axis=0, keepdims=True)
        e = jnp.where(mask, jnp.exp(g), 0.0)
        sm = e / jnp.sum(e, axis=0, keepdims=True)
        weight = jnp.where(mask, sig * sm, weight)
    weight = weight / jnp.sum(jnp.abs(weight))
    mean = jnp.sum(feats * weight, axis=0, keepdims=True) / jnp.sum(weight)
    std = jnp.sqrt(jnp.sum(weight * (feats - mean) ** 2, axis=0, keepdims=True))
    return (feats - mean) / std


if __name__ == "__main__":
    key = jax.random.PRNGKey(0)
    k_feats, k_wl, k_bl, k_wg, k_bg = jax.random.split(key, 5)

    N_PER_BATCH = 8
    NUM_BATCHES = 2
    N = N_PER_BATCH * NUM_BATCHES       # 16 points total
    F = 32                              # num_feats

    feats = jax.random.normal(k_feats, (N, F), dtype=jnp.float32)
    batch_ids = jnp.repeat(jnp.arange(NUM_BATCHES, dtype=jnp.int32),
                           N_PER_BATCH)

    # Linear(num_feats, 1) parameters for local_linear / global_linear.
    w_local = jax.random.normal(k_wl, (F,), dtype=jnp.float32) * 0.1
    b_local = jax.random.normal(k_bl, (1,), dtype=jnp.float32) * 0.1
    w_global = jax.random.normal(k_wg, (F,), dtype=jnp.float32) * 0.1
    b_global = jax.random.normal(k_bg, (1,), dtype=jnp.float32) * 0.1

    out = ain_forward(feats, batch_ids, w_local, b_local, w_global, b_global,
                      NUM_BATCHES)
    out = jax.block_until_ready(out)

    ref = ain_reference(feats, batch_ids, w_local, b_local, w_global, b_global,
                        NUM_BATCHES)
    assert out.shape == (N, F)
    max_err = float(jnp.max(jnp.abs(out.astype(jnp.float32) - ref)))
    assert jnp.allclose(out.astype(jnp.float32), ref, atol=1e-2, rtol=1e-2), max_err

    print("KERNEL_OK")
</pallas_src>

<mosaic_0001>
module attributes {stable_mosaic.version = 11 : i64} {
  func.func @_ain_norm_kernel(%arg0: i32, %arg1: memref<16x32xf32, #tpu.memory_space<vmem>>, %arg2: memref<1x32xf32, #tpu.memory_space<vmem>>, %arg3: memref<1x32xf32, #tpu.memory_space<vmem>>, %arg4: memref<16x32xf32, #tpu.memory_space<vmem>>) attributes {dimension_semantics = [#tpu.dimension_semantics<parallel>], iteration_bounds = array<i64: 1>, scalar_prefetch = 0 : i64, scratch_operands = 0 : i64, tpu.core_type = #tpu.core_type<tc>, window_params = [{transform_indices = @transform_0, window_bounds = array<i64: 16, 32>}, {pipeline_mode = #tpu.pipeline_mode<synchronous>, transform_indices = @transform_1, window_bounds = array<i64: 1, 32>}, {pipeline_mode = #tpu.pipeline_mode<synchronous>, transform_indices = @transform_2, window_bounds = array<i64: 1, 32>}, {transform_indices = @transform_3, window_bounds = array<i64: 16, 32>}]} {
    %c0 = arith.constant 0 : index
    %c0_0 = arith.constant 0 : index
    %0 = vector.load %arg1[%c0, %c0_0] : memref<16x32xf32, #tpu.memory_space<vmem>>, vector<16x32xf32>
    %c0_1 = arith.constant 0 : index
    %c0_2 = arith.constant 0 : index
    %1 = vector.load %arg2[%c0_1, %c0_2] : memref<1x32xf32, #tpu.memory_space<vmem>>, vector<1x32xf32>
    %2 = vector.broadcast %1 : vector<1x32xf32> to vector<16x32xf32>
    %3 = arith.mulf %0, %2 : vector<16x32xf32>
    %c0_3 = arith.constant 0 : index
    %c0_4 = arith.constant 0 : index
    %4 = vector.load %arg3[%c0_3, %c0_4] : memref<1x32xf32, #tpu.memory_space<vmem>>, vector<1x32xf32>
    %5 = vector.broadcast %4 : vector<1x32xf32> to vector<16x32xf32>
    %6 = arith.addf %3, %5 : vector<16x32xf32>
    %c0_5 = arith.constant 0 : index
    %c0_6 = arith.constant 0 : index
    %7 = vector.load %arg4[%c0_5, %c0_6] : memref<16x32xf32, #tpu.memory_space<vmem>>, vector<16x32xf32>
    tpu.vector_store %arg4[%c0_5, %c0_6], %6 {strides = array<i32>} : memref<16x32xf32, #tpu.memory_space<vmem>>, vector<16x32xf32>,
    return
  }
  func.func @transform_0(%arg0: i32) -> (i32, i32) {
    %c0_i32 = arith.constant 0 : i32
    %c0_i32_0 = arith.constant 0 : i32
    return %arg0, %c0_i32 : i32, i32
  }
  func.func @transform_1(%arg0: i32) -> (i32, i32) {
    %c0_i32 = arith.constant 0 : i32
    %c0_i32_0 = arith.constant 0 : i32
    %c0_i32_1 = arith.constant 0 : i32
    return %c0_i32, %c0_i32_0 : i32, i32
  }
  func.func @transform_2(%arg0: i32) -> (i32, i32) {
    %c0_i32 = arith.constant 0 : i32
    %c0_i32_0 = arith.constant 0 : i32
    %c0_i32_1 = arith.constant 0 : i32
    return %c0_i32, %c0_i32_0 : i32, i32
  }
  func.func @transform_3(%arg0: i32) -> (i32, i32) {
    %c0_i32 = arith.constant 0 : i32
    %c0_i32_0 = arith.constant 0 : i32
    return %arg0, %c0_i32 : i32, i32
  }
}

module attributes {stable_mosaic.version = 11 : i64} {
  func.func @_ain_stats_kernel(%arg0: i32, %arg1: memref<16x32xf32, #tpu.memory_space<vmem>>, %arg2: memref<32x2xf32, #tpu.memory_space<vmem>>, %arg3: memref<2xf32, #tpu.memory_space<smem>>, %arg4: memref<16x1xi32, #tpu.memory_space<vmem>>, %arg5: memref<1x16xi32, #tpu.memory_space<vmem>>, %arg6: memref<1x32xf32, #tpu.memory_space<vmem>>, %arg7: memref<1x32xf32, #tpu.memory_space<vmem>>, %arg8: memref<1x8xf32, #tpu.memory_space<vmem>>, %arg9: memref<1x8xf32, #tpu.memory_space<vmem>>, %arg10: memref<1x8xf32, #tpu.memory_space<vmem>>, %arg11: memref<8x32xf32, #tpu.memory_space<vmem>>, %arg12: memref<8x32xf32, #tpu.memory_space<vmem>>) attributes {dimension_semantics = [#tpu.dimension_semantics<arbitrary>], iteration_bounds = array<i64: 1>, scalar_prefetch = 0 : i64, scratch_operands = 5 : i64, tpu.core_type = #tpu.core_type<tc>, window_params = [{transform_indices = @transform_0, window_bounds = array<i64: 16, 32>}, {pipeline_mode = #tpu.pipeline_mode<synchronous>, transform_indices = @transform_1, window_bounds = array<i64: 32, 2>}, {transform_indices = @transform_2, window_bounds = array<i64: 2>}, {transform_indices = @transform_3, window_bounds = array<i64: 16, 1>}, {transform_indices = @transform_4, window_bounds = array<i64: 1, 16>}, {pipeline_mode = #tpu.pipeline_mode<synchronous>, transform_indices = @transform_5, window_bounds = array<i64: 1, 32>}, {pipeline_mode = #tpu.pipeline_mode<synchronous>, transform_indices = @transform_6, window_bounds = array<i64: 1, 32>}]} {
    %c0_i32 = arith.constant 0 : i32
    %0 = arith.cmpi eq, %arg0, %c0_i32 : i32
    %1 = arith.extui %0 : i1 to i32
    %c0_i32_0 = arith.constant 0 : i32
    %2 = arith.cmpi ne, %1, %c0_i32_0 : i32
    scf.if %2 {
      %cst_43 = arith.constant -1.000000e+30 : f32
      %100 = vector.broadcast %cst_43 : f32 to vector<1x8xf32>
      %c0_44 = arith.constant 0 : index
      %c0_45 = arith.constant 0 : index
      %101 = vector.load %arg8[%c0_44, %c0_45] : memref<1x8xf32, #tpu.memory_space<vmem>>, vector<1x8xf32>
      tpu.vector_store %arg8[%c0_44, %c0_45], %100 {strides = array<i32>} : memref<1x8xf32, #tpu.memory_space<vmem>>, vector<1x8xf32>,
      %cst_46 = arith.constant 0.000000e+00 : f32
      %102 = vector.broadcast %cst_46 : f32 to vector<1x8xf32>
      %c0_47 = arith.constant 0 : index
      %c0_48 = arith.constant 0 : index
      %103 = vector.load %arg9[%c0_47, %c0_48] : memref<1x8xf32, #tpu.memory_space<vmem>>, vector<1x8xf32>
      tpu.vector_store %arg9[%c0_47, %c0_48], %102 {strides = array<i32>} : memref<1x8xf32, #tpu.memory_space<vmem>>, vector<1x8xf32>,
      %cst_49 = arith.constant 0.000000e+00 : f32
      %104 = vector.broadcast %cst_49 : f32 to vector<1x8xf32>
      %c0_50 = arith.constant 0 : index
      %c0_51 = arith.constant 0 : index
      %105 = vector.load %arg10[%c0_50, %c0_51] : memref<1x8xf32, #tpu.memory_space<vmem>>, vector<1x8xf32>
      tpu.vector_store %arg10[%c0_50, %c0_51], %104 {strides = array<i32>} : memref<1x8xf32, #tpu.memory_space<vmem>>, vector<1x8xf32>,
      %cst_52 = arith.constant 0.000000e+00 : f32
      %106 = vector.broadcast %cst_52 : f32 to vector<8x32xf32>
      %c0_53 = arith.constant 0 : index
      %c0_54 = arith.constant 0 : index
      %107 = vector.load %arg11[%c0_53, %c0_54] : memref<8x32xf32, #tpu.memory_space<vmem>>, vector<8x32xf32>
      tpu.vector_store %arg11[%c0_53, %c0_54], %106 {strides = array<i32>} : memref<8x32xf32, #tpu.memory_space<vmem>>, vector<8x32xf32>,
      %cst_55 = arith.constant 0.000000e+00 : f32
      %108 = vector.broadcast %cst_55 : f32 to vector<8x32xf32>
      %c0_56 = arith.constant 0 : index
      %c0_57 = arith.constant 0 : index
      %109 = vector.load %arg12[%c0_56, %c0_57] : memref<8x32xf32, #tpu.memory_space<vmem>>, vector<8x32xf32>
      tpu.vector_store %arg12[%c0_56, %c0_57], %108 {strides = array<i32>} : memref<8x32xf32, #tpu.memory_space<vmem>>, vector<8x32xf32>,
    } else {
    }
    %c0 = arith.constant 0 : index
    %c0_1 = arith.constant 0 : index
    %3 = vector.load %arg4[%c0, %c0_1] : memref<16x1xi32, #tpu.memory_space<vmem>>, vector<16x1xi32>
    %c0_i32_2 = arith.constant 0 : i32
    %4 = vector.broadcast %c0_i32_2 : i32 to vector<16x1xi32>
    %5 = arith.cmpi sge, %3, %4 : vector<16x1xi32>
    %c0_3 = arith.constant 0 : index
    %c0_4 = arith.constant 0 : index
    %6 = vector.load %arg1[%c0_3, %c0_4] : memref<16x32xf32, #tpu.memory_space<vmem>>, vector<16x32xf32>
    %cst = arith.constant 0.000000e+00 : f32
    %7 = vector.shape_cast %5 : vector<16x1xi1> to vector<16x1xi1>
    %8 = vector.broadcast %7 : vector<16x1xi1> to vector<16x32xi1>
    %9 = vector.broadcast %cst : f32 to vector<16x32xf32>
    %10 = arith.select %8, %6, %9 : vector<16x32xi1>, vector<16x32xf32>
    %c0_5 = arith.constant 0 : index
    %c0_6 = arith.constant 0 : index
    %11 = vector.load %arg2[%c0_5, %c0_6] : memref<32x2xf32, #tpu.memory_space<vmem>>, vector<32x2xf32>
    %cst_7 = arith.constant dense<0.000000e+00> : vector<16x2xf32>
    %12 = tpu.matmul %10, %11, %cst_7 {dimension_numbers = #tpu.dot_dimension_numbers<[1], [0], [0], [1], [0, 0, 1, 1], [], []>, precision = #tpu.contract_precision<fp32>} : vector<16x32xf32>, vector<32x2xf32>, vector<16x2xf32> -> vector<16x2xf32>
    %13 = vector.extract_strided_slice %12 {offsets = [0, 0], sizes = [16, 1], strides = [1, 1]} : vector<16x2xf32> to vector<16x1xf32>
    %c0_8 = arith.constant 0 : index
    %14 = memref.load %arg3[%c0_8] : memref<2xf32, #tpu.memory_space<smem>>
    %15 = vector.broadcast %14 : f32 to vector<16x1xf32>
    %16 = arith.addf %13, %15 : vector<16x1xf32>
    %17 = vector.extract_strided_slice %12 {offsets = [0, 1], sizes = [16, 1], strides = [1, 1]} : vector<16x2xf32> to vector<16x1xf32>
    %c1 = arith.constant 1 : index
    %18 = memref.load %arg3[%c1] : memref<2xf32, #tpu.memory_space<smem>>
    %19 = vector.broadcast %18 : f32 to vector<16x1xf32>
    %20 = arith.addf %17, %19 : vector<16x1xf32>
    %21 = tpu.iota {dimensions = array<i32: 1>} : vector<16x8xi32>
    %22 = vector.broadcast %3 : vector<16x1xi32> to vector<16x8xi32>
    %23 = arith.cmpi eq, %22, %21 : vector<16x8xi32>
    %24 = arith.extui %23 : vector<16x8xi1> to vector<16x8xi32>
    %25 = arith.sitofp %24 : vector<16x8xi32> to vector<16x8xf32>
    %c0_9 = arith.constant 0 : index
    %c0_10 = arith.constant 0 : index
    %26 = vector.load %arg5[%c0_9, %c0_10] : memref<1x16xi32, #tpu.memory_space<vmem>>, vector<1x16xi32>
    %27 = tpu.iota {dimensions = array<i32: 0>} : vector<8x16xi32>
    %28 = vector.broadcast %26 : vector<1x16xi32> to vector<8x16xi32>
    %29 = arith.cmpi eq, %28, %27 : vector<8x16xi32>
    %30 = arith.extui %29 : vector<8x16xi1> to vector<8x16xi32>
    %31 = arith.sitofp %30 : vector<8x16xi32> to vector<8x16xf32>
    %cst_11 = arith.constant 0.000000e+00 : f32
    %32 = vector.broadcast %cst_11 : f32 to vector<16x8xf32>
    %33 = arith.cmpf ogt, %25, %32 : vector<16x8xf32>
    %cst_12 = arith.constant -1.000000e+30 : f32
    %34 = vector.shape_cast %20 : vector<16x1xf32> to vector<16x1xf32>
    %35 = vector.broadcast %34 : vector<16x1xf32> to vector<16x8xf32>
    %36 = vector.broadcast %cst_12 : f32 to vector<16x8xf32>
    %37 = arith.select %33, %35, %36 : vector<16x8xi1>, vector<16x8xf32>
    %cst_13 = arith.constant dense<0xFF800000> : vector<8xf32>
    %38 = vector.multi_reduction <maximumf>, %37, %cst_13 [0] : vector<16x8xf32> to vector<8xf32>
    %39 = vector.shape_cast %38 : vector<8xf32> to vector<1x8xf32>
    %c0_14 = arith.constant 0 : index
    %c0_15 = arith.constant 0 : index
    %40 = vector.load %arg8[%c0_14, %c0_15] : memref<1x8xf32, #tpu.memory_space<vmem>>, vector<1x8xf32>
    %41 = arith.maximumf %40, %39 : vector<1x8xf32>
    %42 = arith.subf %40, %41 : vector<1x8xf32>
    %43 = math.exp %42 : vector<1x8xf32>
    %44 = tpu.iota {dimensions = array<i32: 0>} : vector<8x8xi32>
    %45 = tpu.iota {dimensions = array<i32: 1>} : vector<8x8xi32>
    %46 = arith.cmpi eq, %44, %45 : vector<8x8xi32>
    %47 = arith.extui %46 : vector<8x8xi1> to vector<8x8xi32>
    %48 = arith.sitofp %47 : vector<8x8xi32> to vector<8x8xf32>
    %49 = vector.broadcast %43 : vector<1x8xf32> to vector<8x8xf32>
    %50 = arith.mulf %48, %49 : vector<8x8xf32>
    %cst_16 = arith.constant dense<0.000000e+00> : vector<8xf32>
    %51 = vector.multi_reduction <add>, %50, %cst_16 [1] : vector<8x8xf32> to vector<8xf32>
    %52 = vector.shape_cast %51 : vector<8xf32> to vector<8x1xf32>
    %53 = vector.broadcast %41 : vector<1x8xf32> to vector<16x8xf32>
    %54 = arith.mulf %25, %53 : vector<16x8xf32>
    %cst_17 = arith.constant dense<0.000000e+00> : vector<16xf32>
    %55 = vector.multi_reduction <add>, %54, %cst_17 [1] : vector<16x8xf32> to vector<16xf32>
    %56 = vector.shape_cast %55 : vector<16xf32> to vector<16x1xf32>
    %57 = arith.subf %20, %56 : vector<16x1xf32>
    %58 = math.exp %57 : vector<16x1xf32>
    %59 = arith.negf %16 : vector<16x1xf32>
    %60 = math.exp %59 : vector<16x1xf32>
    %cst_18 = arith.constant 1.000000e+00 : f32
    %61 = vector.broadcast %cst_18 : f32 to vector<16x1xf32>
    %62 = arith.addf %61, %60 : vector<16x1xf32>
    %63 = arith.divf %61, %62 : vector<16x1xf32>
    %64 = arith.mulf %63, %58 : vector<16x1xf32>
    %65 = vector.broadcast %58 : vector<16x1xf32> to vector<16x8xf32>
    %66 = arith.mulf %25, %65 : vector<16x8xf32>
    %cst_19 = arith.constant dense<0.000000e+00> : vector<8xf32>
    %67 = vector.multi_reduction <add>, %66, %cst_19 [0] : vector<16x8xf32> to vector<8xf32>
    %68 = vector.shape_cast %67 : vector<8xf32> to vector<1x8xf32>
    %69 = vector.broadcast %64 : vector<16x1xf32> to vector<16x8xf32>
    %70 = arith.mulf %25, %69 : vector<16x8xf32>
    %cst_20 = arith.constant dense<0.000000e+00> : vector<8xf32>
    %71 = vector.multi_reduction <add>, %70, %cst_20 [0] : vector<16x8xf32> to vector<8xf32>
    %72 = vector.shape_cast %71 : vector<8xf32> to vector<1x8xf32>
    %73 = vector.broadcast %64 : vector<16x1xf32> to vector<16x32xf32>
    %74 = arith.mulf %73, %10 : vector<16x32xf32>
    %75 = arith.mulf %74, %10 : vector<16x32xf32>
    %cst_21 = arith.constant dense<0.000000e+00> : vector<8x32xf32>
    %76 = tpu.matmul %31, %74, %cst_21 {dimension_numbers = #tpu.dot_dimension_numbers<[1], [0], [0], [1], [0, 0, 1, 1], [], []>, precision = #tpu.contract_precision<fp32>} : vector<8x16xf32>, vector<16x32xf32>, vector<8x32xf32> -> vector<8x32xf32>
    %cst_22 = arith.constant dense<0.000000e+00> : vector<8x32xf32>
    %77 = tpu.matmul %31, %75, %cst_22 {dimension_numbers = #tpu.dot_dimension_numbers<[1], [0], [0], [1], [0, 0, 1, 1], [], []>, precision = #tpu.contract_precision<fp32>} : vector<8x16xf32>, vector<16x32xf32>, vector<8x32xf32> -> vector<8x32xf32>
    %c0_23 = arith.constant 0 : index
    %c0_24 = arith.constant 0 : index
    %78 = vector.load %arg8[%c0_23, %c0_24] : memref<1x8xf32, #tpu.memory_space<vmem>>, vector<1x8xf32>
    tpu.vector_store %arg8[%c0_23, %c0_24], %41 {strides = array<i32>} : memref<1x8xf32, #tpu.memory_space<vmem>>, vector<1x8xf32>,
    %c0_25 = arith.constant 0 : index
    %c0_26 = arith.constant 0 : index
    %79 = vector.load %arg9[%c0_25, %c0_26] : memref<1x8xf32, #tpu.memory_space<vmem>>, vector<1x8xf32>
    %80 = arith.mulf %43, %79 : vector<1x8xf32>
    %81 = arith.addf %80, %68 : vector<1x8xf32>
    %c0_27 = arith.constant 0 : index
    %c0_28 = arith.constant 0 : index
    %82 = vector.load %arg9[%c0_27, %c0_28] : memref<1x8xf32, #tpu.memory_space<vmem>>, vector<1x8xf32>
    tpu.vector_store %arg9[%c0_27, %c0_28], %81 {strides = array<i32>} : memref<1x8xf32, #tpu.memory_space<vmem>>, vector<1x8xf32>,
    %c0_29 = arith.constant 0 : index
    %c0_30 = arith.constant 0 : index
    %83 = vector.load %arg10[%c0_29, %c0_30] : memref<1x8xf32, #tpu.memory_space<vmem>>, vector<1x8xf32>
    %84 = arith.mulf %43, %83 : vector<1x8xf32>
    %85 = arith.addf %84, %72 : vector<1x8xf32>
    %c0_31 = arith.constant 0 : index
    %c0_32 = arith.constant 0 : index
    %86 = vector.load %arg10[%c0_31, %c0_32] : memref<1x8xf32, #tpu.memory_space<vmem>>, vector<1x8xf32>
    tpu.vector_store %arg10[%c0_31, %c0_32], %85 {strides = array<i32>} : memref<1x8xf32, #tpu.memory_space<vmem>>, vector<1x8xf32>,
    %c0_33 = arith.constant 0 : index
    %c0_34 = arith.constant 0 : index
    %87 = vector.load %arg11[%c0_33, %c0_34] : memref<8x32xf32, #tpu.memory_space<vmem>>, vector<8x32xf32>
    %88 = vector.broadcast %52 : vector<8x1xf32> to vector<8x32xf32>
    %89 = arith.mulf %88, %87 : vector<8x32xf32>
    %90 = arith.addf %89, %76 : vector<8x32xf32>
    %c0_35 = arith.constant 0 : index
    %c0_36 = arith.constant 0 : index
    %91 = vector.load %arg11[%c0_35, %c0_36] : memref<8x32xf32, #tpu.memory_space<vmem>>, vector<8x32xf32>
    tpu.vector_store %arg11[%c0_35, %c0_36], %90 {strides = array<i32>} : memref<8x32xf32, #tpu.memory_space<vmem>>, vector<8x32xf32>,
    %c0_37 = arith.constant 0 : index
    %c0_38 = arith.constant 0 : index
    %92 = vector.load %arg12[%c0_37, %c0_38] : memref<8x32xf32, #tpu.memory_space<vmem>>, vector<8x32xf32>
    %93 = vector.broadcast %52 : vector<8x1xf32> to vector<8x32xf32>
    %94 = arith.mulf %93, %92 : vector<8x32xf32>
    %95 = arith.addf %94, %77 : vector<8x32xf32>
    %c0_39 = arith.constant 0 : index
    %c0_40 = arith.constant 0 : index
    %96 = vector.load %arg12[%c0_39, %c0_40] : memref<8x32xf32, #tpu.memory_space<vmem>>, vector<8x32xf32>
    tpu.vector_store %arg12[%c0_39, %c0_40], %95 {strides = array<i32>} : memref<8x32xf32, #tpu.memory_space<vmem>>, vector<8x32xf32>,
    %c0_i32_41 = arith.constant 0 : i32
    %97 = arith.cmpi eq, %arg0, %c0_i32_41 : i32
    %98 = arith.extui %97 : i1 to i32
    %c0_i32_42 = arith.constant 0 : i32
    %99 = arith.cmpi ne, %98, %c0_i32_42 : i32
    scf.if %99 {
      %c0_43 = arith.constant 0 : index
      %c0_44 = arith.constant 0 : index
      %100 = vector.load %arg9[%c0_43, %c0_44] : memref<1x8xf32, #tpu.memory_space<vmem>>, vector<1x8xf32>
      %cst_45 = arith.constant 0.000000e+00 : f32
      %101 = vector.broadcast %cst_45 : f32 to vector<1x8xf32>
      %102 = arith.cmpf ogt, %100, %101 : vector<1x8xf32>
      %cst_46 = arith.constant 1.000000e+00 : f32
      %103 = vector.broadcast %cst_46 : f32 to vector<1x8xf32>
      %104 = arith.divf %103, %100 : vector<1x8xf32>
      %cst_47 = arith.constant 0.000000e+00 : f32
      %105 = vector.broadcast %cst_47 : f32 to vector<1x8xf32>
      %106 = arith.select %102, %104, %105 : vector<1x8xi1>, vector<1x8xf32>
      %107 = tpu.iota {dimensions = array<i32: 0>} : vector<8x8xi32>
      %108 = tpu.iota {dimensions = array<i32: 1>} : vector<8x8xi32>
      %109 = arith.cmpi eq, %107, %108 : vector<8x8xi32>
      %110 = arith.extui %109 : vector<8x8xi1> to vector<8x8xi32>
      %111 = arith.sitofp %110 : vector<8x8xi32> to vector<8x8xf32>
      %112 = vector.broadcast %106 : vector<1x8xf32> to vector<8x8xf32>
      %113 = arith.mulf %111, %112 : vector<8x8xf32>
      %cst_48 = arith.constant dense<0.000000e+00> : vector<8xf32>
      %114 = vector.multi_reduction <add>, %113, %cst_48 [1] : vector<8x8xf32> to vector<8xf32>
      %115 = vector.shape_cast %114 : vector<8xf32> to vector<8x1xf32>
      %c0_49 = arith.constant 0 : index
      %c0_50 = arith.constant 0 : index
      %116 = vector.load %arg10[%c0_49, %c0_50] : memref<1x8xf32, #tpu.memory_space<vmem>>, vector<1x8xf32>
      %117 = arith.mulf %116, %106 : vector<1x8xf32>
      %118 = vector.shape_cast %117 : vector<1x8xf32> to vector<1x1x8xf32>
      %cst_51 = arith.constant dense<0.000000e+00> : vector<1xf32>
      %119 = vector.multi_reduction <add>, %118, %cst_51 [1, 2] : vector<1x1x8xf32> to vector<1xf32>
      %120 = vector.shape_cast %119 : vector<1xf32> to vector<1x1x1xf32>
      %121 = vector.extract %120[0, 0, 0] : f32 from vector<1x1x1xf32>
      %cst_52 = arith.constant 1.000000e+00 : f32
      %122 = arith.divf %cst_52, %121 : f32
      %c0_53 = arith.constant 0 : index
      %c0_54 = arith.constant 0 : index
      %123 = vector.load %arg11[%c0_53, %c0_54] : memref<8x32xf32, #tpu.memory_space<vmem>>, vector<8x32xf32>
      %124 = vector.broadcast %115 : vector<8x1xf32> to vector<8x32xf32>
      %125 = arith.mulf %123, %124 : vector<8x32xf32>
      %cst_55 = arith.constant dense<0.000000e+00> : vector<32xf32>
      %126 = vector.multi_reduction <add>, %125, %cst_55 [0] : vector<8x32xf32> to vector<32xf32>
      %127 = vector.shape_cast %126 : vector<32xf32> to vector<1x32xf32>
      %c0_56 = arith.constant 0 : index
      %c0_57 = arith.constant 0 : index
      %128 = vector.load %arg12[%c0_56, %c0_57] : memref<8x32xf32, #tpu.memory_space<vmem>>, vector<8x32xf32>
      %129 = vector.broadcast %115 : vector<8x1xf32> to vector<8x32xf32>
      %130 = arith.mulf %128, %129 : vector<8x32xf32>
      %cst_58 = arith.constant dense<0.000000e+00> : vector<32xf32>
      %131 = vector.multi_reduction <add>, %130, %cst_58 [0] : vector<8x32xf32> to vector<32xf32>
      %132 = vector.shape_cast %131 : vector<32xf32> to vector<1x32xf32>
      %133 = vector.broadcast %122 : f32 to vector<1x32xf32>
      %134 = arith.mulf %127, %133 : vector<1x32xf32>
      %135 = vector.broadcast %122 : f32 to vector<1x32xf32>
      %136 = arith.mulf %132, %135 : vector<1x32xf32>
      %137 = arith.mulf %134, %134 : vector<1x32xf32>
      %138 = arith.subf %136, %137 : vector<1x32xf32>
      %cst_59 = arith.constant 0.000000e+00 : f32
      %139 = vector.broadcast %cst_59 : f32 to vector<1x32xf32>
      %140 = arith.maximumf %138, %139 : vector<1x32xf32>
      %141 = math.rsqrt %140 : vector<1x32xf32>
      %c0_60 = arith.constant 0 : index
      %c0_61 = arith.constant 0 : index
      %142 = vector.load %arg6[%c0_60, %c0_61] : memref<1x32xf32, #tpu.memory_space<vmem>>, vector<1x32xf32>
      tpu.vector_store %arg6[%c0_60, %c0_61], %141 {strides = array<i32>} : memref<1x32xf32, #tpu.memory_space<vmem>>, vector<1x32xf32>,
      %cst_62 = arith.constant 0.000000e+00 : f32
      %143 = vector.broadcast %cst_62 : f32 to vector<1x32xf32>
      %144 = arith.subf %143, %134 : vector<1x32xf32>
      %145 = arith.mulf %144, %141 : vector<1x32xf32>
      %c0_63 = arith.constant 0 : index
      %c0_64 = arith.constant 0 : index
      %146 = vector.load %arg7[%c0_63, %c0_64] : memref<1x32xf32, #tpu.memory_space<vmem>>, vector<1x32xf32>
      tpu.vector_store %arg7[%c0_63, %c0_64], %145 {strides = array<i32>} : memref<1x32xf32, #tpu.memory_space<vmem>>, vector<1x32xf32>,
    } else {
    }
    return
  }
  func.func @transform_0(%arg0: i32) -> (i32, i32) {
    %c0_i32 = arith.constant 0 : i32
    %c0_i32_0 = arith.constant 0 : i32
    return %arg0, %c0_i32 : i32, i32
  }
  func.func @transform_1(%arg0: i32) -> (i32, i32) {
    %c0_i32 = arith.constant 0 : i32
    %c0_i32_0 = arith.constant 0 : i32
    %c0_i32_1 = arith.constant 0 : i32
    return %c0_i32, %c0_i32_0 : i32, i32
  }
  func.func @transform_2(%arg0: i32) -> i32 {
    %c0_i32 = arith.constant 0 : i32
    %c0_i32_0 = arith.constant 0 : i32
    return %c0_i32 : i32
  }
  func.func @transform_3(%arg0: i32) -> (i32, i32) {
    %c0_i32 = arith.constant 0 : i32
    %c0_i32_0 = arith.constant 0 : i32
    return %arg0, %c0_i32 : i32, i32
  }
  func.func @transform_4(%arg0: i32) -> (i32, i32) {
    %c0_i32 = arith.constant 0 : i32
    %c0_i32_0 = arith.constant 0 : i32
    return %c0_i32, %arg0 : i32, i32
  }
  func.func @transform_5(%arg0: i32) -> (i32, i32) {
    %c0_i32 = arith.constant 0 : i32
    %c0_i32_0 = arith.constant 0 : i32
    %c0_i32_1 = arith.constant 0 : i32
    return %c0_i32, %c0_i32_0 : i32, i32
  }
  func.func @transform_6(%arg0: i32) -> (i32, i32) {
    %c0_i32 = arith.constant 0 : i32
    %c0_i32_0 = arith.constant 0 : i32
    %c0_i32_1 = arith.constant 0 : i32
    return %c0_i32, %c0_i32_0 : i32, i32
  }
}

</mosaic_0001>

<llo_original>
// kernel: ain_forward.3
$region0: #{ain_forward.3}
  #allocation0 [shape = 'u32[]', space=smem, size = 0x4, offset = 0x4, fixed_abs, tag = 'smem constant byte address 0x4 - core index']
  #allocation1 [shape = 'u32[72,128]{1,0:T(1,128)}', space=vmem, size = 0x9000, scoped, tag = 'internal scratch']
  %s0 = inlined_call_operand.vmem [shape: f32[16,32], index: 0, kind: input, shape index: {}]
  %s1 = inlined_call_operand.vmem [shape: f32[1,32], index: 1, kind: input, shape index: {}]
  %s2 = inlined_call_operand.vmem [shape: f32[1,32], index: 2, kind: input, shape index: {}]
  %s3 = inlined_call_operand.hbm [shape: f32[16,32], index: 3, kind: output, shape index: {}]
  %s4 = sld [smem:[#allocation0]]
  $region22: #{ain_forward.3} parent=0
    _
  %s6 = ssub.s32 1, %s4
  %s7 = scalar_select 0, %s6, %s4
  $region1: #{ain_forward.3} parent=0
    #allocation2 [shape = 'u8[8192]{0}', space=vmem, size = 0x2000, scoped, tag = 'output window, operand 0, single buffered']
    #allocation3 [shape = 's32[1]{0}', space=sflag, size = 0x4, scoped, tag = 'scoped memory for ain_forward.3']
    %8 = vsyncpa [#allocation3], 0
    // Predicated region
    $region2: #{ain_forward.3} parent=1 // pred_check
      _
    $region3: #{ain_forward.3} parent=1 // pred_check_branch
      %10 = sbr.rel (0) target = $region5
    $region4: #{ain_forward.3} parent=1 // pred_region
      _
    $region5: #{ain_forward.3} parent=1 // pred_fallthru
      _
    // Predicated region
    $region6: #{ain_forward.3} parent=1 // pred_check
      _
    $region7: #{ain_forward.3} parent=1 // pred_check_branch
      %12 = sbr.rel (0) target = $region9
    $region8: #{ain_forward.3} parent=1 // pred_region
      _
    $region9: #{ain_forward.3} parent=1 // pred_fallthru
      _
    // Predicated region
    $region10: #{ain_forward.3} parent=1 // pred_check
      _
    $region11: #{ain_forward.3} parent=1 // pred_check_branch
      %14 = sbr.rel (0) target = $region13
    $region12: #{ain_forward.3} parent=1 // pred_region
      _
    $region13: #{ain_forward.3} parent=1 // pred_fallthru
      _
    %v15 = vld [vmem:[%s0] sm:$0xff]
    %v16 = vld [vmem:[%s0 + $0x8] sm:$0xff]
    %v17 = vld [vmem:[%s1] sm:$0x1]
    %v19 = vperm.slane %v17, 0
    %v21 = vmul.f32 %v15, %v19
    %v22 = vmul.f32 %v16, %v19
    %v23 = vld [vmem:[%s2] sm:$0x1]
    %v25 = vperm.slane %v23, 0
    %v27 = vadd.f32 %v21, %v25
    %v28 = vadd.f32 %v22, %v25
    %vm29 = vcmask 261120
    %30 = vst.msk [vmem:[#allocation2] sm:$0xff] %vm29, %v27
    %31 = vst.msk [vmem:[#allocation2 + $0x8] sm:$0xff] %vm29, %v28
    // Predicated region
    $region14: #{ain_forward.3} parent=1 // pred_check
      _
    $region15: #{ain_forward.3} parent=1 // pred_check_branch
      %33 = sbr.rel (0) target = $region17
    $region16: #{ain_forward.3} parent=1 // pred_region
      %35 = vsyncadd [#allocation3], 0
      %s36 = sshll.u32 [#allocation2], 4
      %s37 = int_to_ptr.vmem [resolvable:$true] %s36
      %s38 = sshll.u32 %s3, 4
      %s39 = int_to_ptr.hbm [resolvable:$true] %s38
      %44 = dma.vmem_to_hbm [thread:$0]  %s37, 256, %s39, [#allocation3], 128, 128, 8
    $region17: #{ain_forward.3} parent=1 // pred_fallthru
      _
    // Predicated region
    $region18: #{ain_forward.3} parent=1 // pred_check
      _
    $region19: #{ain_forward.3} parent=1 // pred_check_branch
      %46 = sbr.rel (0) target = $region21
    $region20: #{ain_forward.3} parent=1 // pred_region
      %48 = dma.done [#allocation3], 256
    $region21: #{ain_forward.3} parent=1 // pred_fallthru
      _
    %49 = vsyncpa [#allocation3], 1

// kernel: ain_forward.2
$region0: #{ain_forward.2}
  #allocation0 [shape = 'u32[]', space=smem, size = 0x4, offset = 0x4, fixed_abs, tag = 'smem constant byte address 0x4 - core index']
  #allocation1 [shape = 'u32[72,128]{1,0:T(1,128)}', space=vmem, size = 0x9000, scoped, tag = 'internal scratch']
  #allocation2 [shape = 'f32[1,8]{1,0:T(1,128)}', space=vmem, size = 0x200, scoped, tag = 'scratch operand']
  #allocation3 [shape = 'f32[1,8]{1,0:T(1,128)}', space=vmem, size = 0x200, scoped, tag = 'scratch operand']
  #allocation4 [shape = 'f32[1,8]{1,0:T(1,128)}', space=vmem, size = 0x200, scoped, tag = 'scratch operand']
  #allocation5 [shape = 'f32[8,32]{1,0:T(8,128)}', space=vmem, size = 0x1000, scoped, tag = 'scratch operand']
  #allocation6 [shape = 'f32[8,32]{1,0:T(8,128)}', space=vmem, size = 0x1000, scoped, tag = 'scratch operand']
  %s0 = inlined_call_operand.vmem [shape: f32[16,32], index: 0, kind: input, shape index: {}]
  %s1 = inlined_call_operand.vmem [shape: f32[32,2], index: 1, kind: input, shape index: {}]
  %s2 = inlined_call_operand.vmem [shape: f32[2], index: 2, kind: input, shape index: {}]
  %s3 = inlined_call_operand.vmem [shape: s32[16,1], index: 3, kind: input, shape index: {}]
  %s4 = inlined_call_operand.vmem [shape: s32[1,16], index: 4, kind: input, shape index: {}]
  %s5 = inlined_call_operand.vmem [shape: f32[1,32], index: 5, kind: output, shape index: {0}]
  %s6 = inlined_call_operand.vmem [shape: f32[1,32], index: 6, kind: output, shape index: {1}]
  %7 = xla_tuple %s5, %s6
  %s8 = sld [smem:[#allocation0]]
  $region50: #{ain_forward.2} parent=0
    _
  %s10 = ssub.s32 1, %s8
  %s11 = scalar_select 0, %s10, %s8
  $region1: #{ain_forward.2} parent=0
    #allocation7 [shape = 'u8[512]{0}', space=smem, size = 0x200, scoped, tag = 'input window, operand 2, single buffered']
    #allocation8 [shape = 's32[1]{0}', space=sflag, size = 0x4, scoped, tag = 'scoped memory for ain_forward.2']
    %12 = vsyncpa [#allocation8], 0
    // Predicated region
    $region2: #{ain_forward.2} parent=1 // pred_check
      _
    $region3: #{ain_forward.2} parent=1 // pred_check_branch
      %14 = sbr.rel (0) target = $region5
    $region4: #{ain_forward.2} parent=1 // pred_region
      _
    $region5: #{ain_forward.2} parent=1 // pred_fallthru
      _
    // Predicated region
    $region6: #{ain_forward.2} parent=1 // pred_check
      _
    $region7: #{ain_forward.2} parent=1 // pred_check_branch
      %16 = sbr.rel (0) target = $region9
    $region8: #{ain_forward.2} parent=1 // pred_region
      _
    $region9: #{ain_forward.2} parent=1 // pred_fallthru
      _
    // Predicated region
    $region10: #{ain_forward.2} parent=1 // pred_check
      _
    $region11: #{ain_forward.2} parent=1 // pred_check_branch
      %18 = sbr.rel (0) target = $region13
    $region12: #{ain_forward.2} parent=1 // pred_region
      %20 = vsyncadd [#allocation8], 0
      %s22 = sshll.u32 %s2, 4
      %s23 = int_to_ptr.vmem [resolvable:$true] %s22
      %25 = dma.vmem_to_smem %s23, 16, [#allocation7], [#allocation8]
    $region13: #{ain_forward.2} parent=1 // pred_fallthru
      _
    // Predicated region
    $region14: #{ain_forward.2} parent=1 // pred_check
      _
    $region15: #{ain_forward.2} parent=1 // pred_check_branch
      %27 = sbr.rel (0) target = $region17
    $region16: #{ain_forward.2} parent=1 // pred_region
      _
    $region17: #{ain_forward.2} parent=1 // pred_fallthru
      _
    // Predicated region
    $region18: #{ain_forward.2} parent=1 // pred_check
      _
    $region19: #{ain_forward.2} parent=1 // pred_check_branch
      %29 = sbr.rel (0) target = $region21
    $region20: #{ain_forward.2} parent=1 // pred_region
      _
    $region21: #{ain_forward.2} parent=1 // pred_fallthru
      _
    // Predicated region
    $region22: #{ain_forward.2} parent=1 // pred_check
      _
    $region23: #{ain_forward.2} parent=1 // pred_check_branch
      %31 = sbr.rel (0) target = $region25
    $region24: #{ain_forward.2} parent=1 // pred_region
      %33 = dma.done [#allocation8], 16
    $region25: #{ain_forward.2} parent=1 // pred_fallthru
      _
    %34 = sfence
    %p35 = scmp.eq.s32.totalorder 0, 0
    // Predicated region
    $region26: #{ain_forward.2} parent=1 // pred_check
      %p36 = pneg %p35
    $region27: #{ain_forward.2} parent=1 // pred_check_branch
      %38 = sbr.rel (%p36) target = $region29
    $region28: #{ain_forward.2} parent=1 // pred_region
      %vm39 = vcmask 57344
      %40 = vst.msk [vmem:[#allocation2] sm:$0x1] %vm39, -1e+30
      %41 = vst.msk [vmem:[#allocation3] sm:$0x1] %vm39, 0.0
      %42 = vst.msk [vmem:[#allocation4] sm:$0x1] %vm39, 0.0
      %vm43 = vcmask 261120
      %44 = vst.msk [vmem:[#allocation5] sm:$0xff] %vm43, 0.0
      %45 = vst.msk [vmem:[#allocation6] sm:$0xff] %vm43, 0.0
    $region29: #{ain_forward.2} parent=1 // pred_fallthru
      _
    %v46 = vld [vmem:[%s3] sm:$0xff]
    %v47 = vld [vmem:[%s3 + $0x8] sm:$0xff]
    %vm48 = vcmp.ge.s32.totalorder %v46, 0
    %vm49 = vcmp.ge.s32.totalorder %v47, 0
    %v50 = vld [vmem:[%s0] sm:$0xff]
    %v51 = vld [vmem:[%s0 + $0x8] sm:$0xff]
    %v52 = vsel %vm48, 1, 0
    %v53 = vsel %vm49, 1, 0
    %54 = vset.pattern.permute.xlu0 0
    %55 = vperm.xlu0 %54, %v52
    %v56 = vpop.permute.xlu0 %55
    %57 = vset.pattern.permute.xlu0 0
    %58 = vperm.xlu0 %57, %v53
    %v59 = vpop.permute.xlu0 %58
    %vm60 = vcmp.eq.s32.totalorder %v56, 1
    %vm61 = vcmp.eq.s32.totalorder %v59, 1
    %v62 = vsel %vm60, %v50, 0.0
    %v63 = vsel %vm61, %v51, 0.0
    %v64 = vld [vmem:[%s1] sm:$0xff]
    %v65 = vld [vmem:[%s1 + $0x8] sm:$0xff]
    %v66 = vld [vmem:[%s1 + $0x10] sm:$0xff]
    %v67 = vld [vmem:[%s1 + $0x18] sm:$0xff]
    %vm68 = vcmask 261120
    %v70 = vsel %vm68, %v62, 0
    %v73 = vsel %vm68, %v63, 0
    %75 = vmatpush.msra.mxu0 0.0
    %76 = vmatpush.msra.mxu0 0.0
    %77 = vmatpush.msra.mxu0 0.0
    %78 = vmatpush.msra.mxu0 0.0
    %79 = vmatpush.msra.mxu0 0.0
    %80 = vmatpush.msra.mxu0 0.0
    %81 = vmatpush.msra.mxu0 0.0
    %82 = vmatpush.msra.mxu0 0.0
    %83 = vmatpush.msra.mxu0 0.0
    %84 = vmatpush.msra.mxu0 0.0
    %85 = vmatpush.msra.mxu0 0.0
    %86 = vmatpush.msra.mxu0 0.0
    %v87 = vand.u32 %v67, 4294901760
    %88 = vmatpush.msra.mxu0 %v87
    %v89 = vand.u32 %v66, 4294901760
    %90 = vmatpush.msra.mxu0 %v89
    %v91 = vand.u32 %v65, 4294901760
    %92 = vmatpush.msra.mxu0 %v91
    %v93 = vand.u32 %v64, 4294901760
    %94 = vmatpush.msra.mxu0 %v93
    %v95 = vand.u32 %v70, 4294901760
    %v96 = vsub.f32 %v70, %v95
    %v97 = vand.u32 %v96, 4294901760
    %v98 = vsub.f32 %v96, %v97
    %v99 = vand.u32 %v98, 4294901760
    %100 = vmatmul.f32.gmra.mxu0 %v99
    %v101 = vpop.f32.mrf.mxu0
    %v102 = vadd.f32 0.0, %v101
    %v103 = vand.u32 %v73, 4294901760
    %v104 = vsub.f32 %v73, %v103
    %v105 = vand.u32 %v104, 4294901760
    %v106 = vsub.f32 %v104, %v105
    %v107 = vand.u32 %v106, 4294901760
    %108 = vmatmul.f32.gmra.mxu0 %v107
    %v109 = vpop.f32.mrf.mxu0
    %v110 = vadd.f32 0.0, %v109
    %111 = vdwg.mxu0
    %112 = vmatpush.msra.mxu0 0.0
    %113 = vmatpush.msra.mxu0 0.0
    %114 = vmatpush.msra.mxu0 0.0
    %115 = vmatpush.msra.mxu0 0.0
    %116 = vmatpush.msra.mxu0 0.0
    %117 = vmatpush.msra.mxu0 0.0
    %118 = vmatpush.msra.mxu0 0.0
    %119 = vmatpush.msra.mxu0 0.0
    %120 = vmatpush.msra.mxu0 0.0
    %121 = vmatpush.msra.mxu0 0.0
    %122 = vmatpush.msra.mxu0 0.0
    %123 = vmatpush.msra.mxu0 0.0
    %v124 = vand.u32 %v67, 4294901760
    %v125 = vsub.f32 %v67, %v124
    %v126 = vand.u32 %v125, 4294901760
    %v127 = vsub.f32 %v125, %v126
    %v128 = vand.u32 %v127, 4294901760
    %129 = vmatpush.msra.mxu0 %v128
    %v130 = vand.u32 %v66, 4294901760
    %v131 = vsub.f32 %v66, %v130
    %v132 = vand.u32 %v131, 4294901760
    %v133 = vsub.f32 %v131, %v132
    %v134 = vand.u32 %v133, 4294901760
    %135 = vmatpush.msra.mxu0 %v134
    %v136 = vand.u32 %v65, 4294901760
    %v137 = vsub.f32 %v65, %v136
    %v138 = vand.u32 %v137, 4294901760
    %v139 = vsub.f32 %v137, %v138
    %v140 = vand.u32 %v139, 4294901760
    %141 = vmatpush.msra.mxu0 %v140
    %v142 = vand.u32 %v64, 4294901760
    %v143 = vsub.f32 %v64, %v142
    %v144 = vand.u32 %v143, 4294901760
    %v145 = vsub.f32 %v143, %v144
    %v146 = vand.u32 %v145, 4294901760
    %147 = vmatpush.msra.mxu0 %v146
    %v148 = vand.u32 %v70, 4294901760
    %149 = vmatmul.f32.gmra.mxu0 %v148
    %v150 = vpop.f32.mrf.mxu0
    %v151 = vadd.f32 %v102, %v150
    %v152 = vand.u32 %v73, 4294901760
    %153 = vmatmul.f32.gmra.mxu0 %v152
    %v154 = vpop.f32.mrf.mxu0
    %v155 = vadd.f32 %v110, %v154
    %156 = vdwg.mxu0
    %157 = vmatpush.msra.mxu0 0.0
    %158 = vmatpush.msra.mxu0 0.0
    %159 = vmatpush.msra.mxu0 0.0
    %160 = vmatpush.msra.mxu0 0.0
    %161 = vmatpush.msra.mxu0 0.0
    %162 = vmatpush.msra.mxu0 0.0
    %163 = vmatpush.msra.mxu0 0.0
    %164 = vmatpush.msra.mxu0 0.0
    %165 = vmatpush.msra.mxu0 0.0
    %166 = vmatpush.msra.mxu0 0.0
    %167 = vmatpush.msra.mxu0 0.0
    %168 = vmatpush.msra.mxu0 0.0
    %v169 = vand.u32 %v67, 4294901760
    %v170 = vsub.f32 %v67, %v169
    %171 = vmatpush.msra.mxu0 %v170
    %v172 = vand.u32 %v66, 4294901760
    %v173 = vsub.f32 %v66, %v172
    %174 = vmatpush.msra.mxu0 %v173
    %v175 = vand.u32 %v65, 4294901760
    %v176 = vsub.f32 %v65, %v175
    %177 = vmatpush.msra.mxu0 %v176
    %v178 = vand.u32 %v64, 4294901760
    %v179 = vsub.f32 %v64, %v178
    %180 = vmatpush.msra.mxu0 %v179
    %v181 = vand.u32 %v70, 4294901760
    %v182 = vsub.f32 %v70, %v181
    %183 = vmatmul.f32.gmra.mxu0 %v182
    %v184 = vpop.f32.mrf.mxu0
    %v185 = vadd.f32 %v151, %v184
    %v186 = vand.u32 %v73, 4294901760
    %v187 = vsub.f32 %v73, %v186
    %188 = vmatmul.f32.gmra.mxu0 %v187
    %v189 = vpop.f32.mrf.mxu0
    %v190 = vadd.f32 %v155, %v189
    %191 = vdwg.mxu0
    %192 = vmatpush.msra.mxu0 0.0
    %193 = vmatpush.msra.mxu0 0.0
    %194 = vmatpush.msra.mxu0 0.0
    %195 = vmatpush.msra.mxu0 0.0
    %196 = vmatpush.msra.mxu0 0.0
    %197 = vmatpush.msra.mxu0 0.0
    %198 = vmatpush.msra.mxu0 0.0
    %199 = vmatpush.msra.mxu0 0.0
    %200 = vmatpush.msra.mxu0 0.0
    %201 = vmatpush.msra.mxu0 0.0
    %202 = vmatpush.msra.mxu0 0.0
    %203 = vmatpush.msra.mxu0 0.0
    %v204 = vand.u32 %v67, 4294901760
    %205 = vmatpush.msra.mxu0 %v204
    %v206 = vand.u32 %v66, 4294901760
    %207 = vmatpush.msra.mxu0 %v206
    %v208 = vand.u32 %v65, 4294901760
    %209 = vmatpush.msra.mxu0 %v208
    %v210 = vand.u32 %v64, 4294901760
    %211 = vmatpush.msra.mxu0 %v210
    %v212 = vand.u32 %v70, 4294901760
    %v213 = vsub.f32 %v70, %v212
    %v214 = vand.u32 %v213, 4294901760
    %215 = vmatmul.f32.gmra.mxu0 %v214
    %v216 = vpop.f32.mrf.mxu0
    %v217 = vadd.f32 %v185, %v216
    %v218 = vand.u32 %v73, 4294901760
    %v219 = vsub.f32 %v73, %v218
    %v220 = vand.u32 %v219, 4294901760
    %221 = vmatmul.f32.gmra.mxu0 %v220
    %v222 = vpop.f32.mrf.mxu0
    %v223 = vadd.f32 %v190, %v222
    %224 = vdwg.mxu0
    %225 = vmatpush.msra.mxu0 0.0
    %226 = vmatpush.msra.mxu0 0.0
    %227 = vmatpush.msra.mxu0 0.0
    %228 = vmatpush.msra.mxu0 0.0
    %229 = vmatpush.msra.mxu0 0.0
    %230 = vmatpush.msra.mxu0 0.0
    %231 = vmatpush.msra.mxu0 0.0
    %232 = vmatpush.msra.mxu0 0.0
    %233 = vmatpush.msra.mxu0 0.0
    %234 = vmatpush.msra.mxu0 0.0
    %235 = vmatpush.msra.mxu0 0.0
    %236 = vmatpush.msra.mxu0 0.0
    %v237 = vand.u32 %v67, 4294901760
    %v238 = vsub.f32 %v67, %v237
    %v239 = vand.u32 %v238, 4294901760
    %240 = vmatpush.msra.mxu0 %v239
    %v241 = vand.u32 %v66, 4294901760
    %v242 = vsub.f32 %v66, %v241
    %v243 = vand.u32 %v242, 4294901760
    %244 = vmatpush.msra.mxu0 %v243
    %v245 = vand.u32 %v65, 4294901760
    %v246 = vsub.f32 %v65, %v245
    %v247 = vand.u32 %v246, 4294901760
    %248 = vmatpush.msra.mxu0 %v247
    %v249 = vand.u32 %v64, 4294901760
    %v250 = vsub.f32 %v64, %v249
    %v251 = vand.u32 %v250, 4294901760
    %252 = vmatpush.msra.mxu0 %v251
    %v253 = vand.u32 %v70, 4294901760
    %254 = vmatmul.f32.gmra.mxu0 %v253
    %v255 = vpop.f32.mrf.mxu0
    %v256 = vadd.f32 %v217, %v255
    %v257 = vand.u32 %v73, 4294901760
    %258 = vmatmul.f32.gmra.mxu0 %v257
    %v259 = vpop.f32.mrf.mxu0
    %v260 = vadd.f32 %v223, %v259
    %261 = vdwg.mxu0
    %262 = vmatpush.msra.mxu0 0.0
    %263 = vmatpush.msra.mxu0 0.0
    %264 = vmatpush.msra.mxu0 0.0
    %265 = vmatpush.msra.mxu0 0.0
    %266 = vmatpush.msra.mxu0 0.0
    %267 = vmatpush.msra.mxu0 0.0
    %268 = vmatpush.msra.mxu0 0.0
    %269 = vmatpush.msra.mxu0 0.0
    %270 = vmatpush.msra.mxu0 0.0
    %271 = vmatpush.msra.mxu0 0.0
    %272 = vmatpush.msra.mxu0 0.0
    %273 = vmatpush.msra.mxu0 0.0
    %v274 = vand.u32 %v67, 4294901760
    %275 = vmatpush.msra.mxu0 %v274
    %v276 = vand.u32 %v66, 4294901760
    %277 = vmatpush.msra.mxu0 %v276
    %v278 = vand.u32 %v65, 4294901760
    %279 = vmatpush.msra.mxu0 %v278
    %v280 = vand.u32 %v64, 4294901760
    %281 = vmatpush.msra.mxu0 %v280
    %v282 = vand.u32 %v70, 4294901760
    %283 = vmatmul.f32.gmra.mxu0 %v282
    %v284 = vpop.f32.mrf.mxu0
    %v285 = vadd.f32 %v256, %v284
    %v286 = vand.u32 %v73, 4294901760
    %287 = vmatmul.f32.gmra.mxu0 %v286
    %v288 = vpop.f32.mrf.mxu0
    %v289 = vadd.f32 %v260, %v288
    %290 = vdwg.mxu0
    %s291 = sld [smem:[#allocation7]]
    %v292 = vstv %s291
    %v293 = vadd.f32 %v285, %v292
    %v294 = vadd.f32 %v289, %v292
    %s295 = sld [smem:[#allocation7 + $0x1]]
    %v296 = vstv %s295
    %v297 = vadd.f32 %v285, %v296
    %v298 = vadd.f32 %v289, %v296
    %v299 = vlaneseq
    %v300 = vand.u32 %v299, 127
    %301 = vset.pattern.permute.xlu0 0
    %302 = vperm.xlu0 %301, %v46
    %v303 = vpop.permute.xlu0 %302
    %304 = vset.pattern.permute.xlu0 0
    %305 = vperm.xlu0 %304, %v47
    %v306 = vpop.permute.xlu0 %305
    %vm307 = vcmp.eq.s32.totalorder %v303, %v300
    %vm308 = vcmp.eq.s32.totalorder %v306, %v300
    %v309 = vsel %vm307, 1, 0
    %v310 = vsel %vm308, 1, 0
    %v311 = vcvt.s32.f32 %v309
    %v312 = vcvt.s32.f32 %v310
    %v313 = vld [vmem:[%s4] sm:$0x1]
    %v314 = vlaneseq
    %v315 = vshrl.u32 %v314, 7
    %v316 = vperm.slane %v313, 0
    %vm317 = vcmp.eq.s32.totalorder %v316, %v315
    %v318 = vsel %vm317, 1, 0
    %v319 = vcvt.s32.f32 %v318
    %vm320 = vcmp.gt.f32.partialorder %v311, 0.0
    %vm321 = vcmp.gt.f32.partialorder %v312, 0.0
    %323 = vset.pattern.permute.xlu0 1
    %324 = vperm.xlu0 %323, %v297
    %v325 = vpop.permute.xlu0 %324
    %328 = vset.pattern.permute.xlu0 1
    %329 = vperm.xlu0 %328, %v298
    %v330 = vpop.permute.xlu0 %329
    %v332 = vsel %vm320, %v325, -1e+30
    %v333 = vsel %vm321, %v330, -1e+30
    %vm334 = vcmask 64512
    %v335 = vsel %vm334, %v332, -inf
    %v336 = vsel %vm334, %v333, -inf
    %v337 = vmax.f32 %v335, %v336
    %v338 = vrot.slane %v337, 4
    %v339 = vmax.f32 %v337, %v338
    %v340 = vrot.slane %v339, 2
    %v341 = vmax.f32 %v339, %v340
    %v342 = vrot.slane %v341, 1
    %v343 = vmax.f32 %v341, %v342
    %v344 = vld [vmem:[#allocation2] sm:$0x1]
    %v345 = vmax.f32 %v344, %v343
    %v346 = vsub.f32 %v344, %v345
    %v347 = vmul.f32 %v346, 1.442695
    %v348 = vpow.pop %v347
    %vm349 = vcmp.eq.s32.totalorder %v315, %v300
    %v350 = vsel %vm349, 1, 0
    %v351 = vcvt.s32.f32 %v350
    %v353 = vperm.slane %v348, 0
    %v355 = vmul.f32 %v351, %v353
    %v356 = vsel %vm334, %v355, 0.0
    %357 = vadd.xlane.f32.xlu0 %v356
    %v358 = vpop.xlane.xlu0 %357
    %v360 = vperm.slane %v345, 0
    %v362 = vmul.f32 %v311, %v360
    %v363 = vmul.f32 %v312, %v360
    %v364 = vsel %vm334, %v362, 0.0
    %365 = vadd.xlane.f32.xlu0 %v364
    %v366 = vpop.xlane.xlu0 %365
    %v367 = vsel %vm334, %v363, 0.0
    %368 = vadd.xlane.f32.xlu0 %v367
    %v369 = vpop.xlane.xlu0 %368
    %v370 = vsub.f32 %v297, %v366
    %v371 = vsub.f32 %v298, %v369
    %v372 = vmul.f32 %v370, 1.442695
    %v373 = vpow.pop %v372
    %v374 = vmul.f32 %v371, 1.442695
    %v375 = vpow.pop %v374
    %v376 = vxor.u32 %v293, 2147483648
    %v377 = vxor.u32 %v294, 2147483648
    %v378 = vmul.f32 %v376, 1.442695
    %v379 = vpow.pop %v378
    %v380 = vmul.f32 %v377, 1.442695
    %v381 = vpow.pop %v380
    %v382 = vadd.f32 %v379, 1.0
    %v383 = vadd.f32 %v381, 1.0
    %v384 = vrcp.pop %v382
    %v385 = vmul.f32 %v382, %v384
    %v386 = vsub.f32 1.0, %v385
    %v387 = vmul.f32 %v384, %v386
    %v388 = vadd.f32 %v384, %v387
    %vm389 = vweird.f32 %v382
    %vm390 = vweird.f32 %v384
    %vm391 = vmor %vm389, %vm390
    %v392 = vsel %vm391, %v384, %v388
    %v393 = vand.u32 2147483647, %v382
    %vm394 = vcmp.eq.f32.partialorder %v393, 8.507059e+37
    %v395 = vand.u32 %v382, 2147483648
    %v396 = vor.u32 1.1754944e-38, %v395
    %v397 = vsel %vm394, %v396, %v392
    %v398 = vmul.f32 1.0, %v397
    %v399 = vrcp.pop %v383
    %v400 = vmul.f32 %v383, %v399
    %v401 = vsub.f32 1.0, %v400
    %v402 = vmul.f32 %v399, %v401
    %v403 = vadd.f32 %v399, %v402
    %vm404 = vweird.f32 %v383
    %vm405 = vweird.f32 %v399
    %vm406 = vmor %vm404, %vm405
    %v407 = vsel %vm406, %v399, %v403
    %v408 = vand.u32 2147483647, %v383
    %vm409 = vcmp.eq.f32.partialorder %v408, 8.507059e+37
    %v410 = vand.u32 %v383, 2147483648
    %v411 = vor.u32 1.1754944e-38, %v410
    %v412 = vsel %vm409, %v411, %v407
    %v413 = vmul.f32 1.0, %v412
    %416 = vrot.lane.b32.xlu0 %v373, 127
    %v417 = vpop.permute.xlu0 %416
    %418 = vrot.lane.b32.xlu0 %v375, 127
    %v419 = vpop.permute.xlu0 %418
    %v422 = vmul.f32 %v398, %v417
    %v423 = vmul.f32 %v413, %v419
    %424 = vset.pattern.permute.xlu0 1
    %425 = vperm.xlu0 %424, %v373
    %v426 = vpop.permute.xlu0 %425
    %428 = vset.pattern.permute.xlu0 1
    %429 = vperm.xlu0 %428, %v375
    %v430 = vpop.permute.xlu0 %429
    %v432 = vmul.f32 %v311, %v426
    %v433 = vmul.f32 %v312, %v430
    %v434 = vsel %vm334, %v432, 0.0
    %v435 = vsel %vm334, %v433, 0.0
    %v436 = vadd.f32 %v434, %v435
    %v437 = vrot.slane %v436, 4
    %v438 = vadd.f32 %v436, %v437
    %v439 = vrot.slane %v438, 2
    %v440 = vadd.f32 %v438, %v439
    %v441 = vrot.slane %v440, 1
    %v442 = vadd.f32 %v440, %v441
    %444 = vset.pattern.permute.xlu0 0
    %445 = vperm.xlu0 %444, %v422
    %v446 = vpop.permute.xlu0 %445
    %449 = vset.pattern.permute.xlu0 0
    %450 = vperm.xlu0 %449, %v423
    %v451 = vpop.permute.xlu0 %450
    %v453 = vmul.f32 %v311, %v446
    %v454 = vmul.f32 %v312, %v451
    %v455 = vsel %vm334, %v453, 0.0
    %v456 = vsel %vm334, %v454, 0.0
    %v457 = vadd.f32 %v455, %v456
    %v458 = vrot.slane %v457, 4
    %v459 = vadd.f32 %v457, %v458
    %v460 = vrot.slane %v459, 2
    %v461 = vadd.f32 %v459, %v460
    %v462 = vrot.slane %v461, 1
    %v463 = vadd.f32 %v461, %v462
    %v464 = vmul.f32 %v446, %v62
    %v465 = vmul.f32 %v451, %v63
    %v466 = vmul.f32 %v464, %v62
    %v467 = vmul.f32 %v465, %v63
    %vm468 = vcmask 130048
    %v470 = vsel %vm468, %v319, 0
    %472 = vmatpush.msra.mxu0 0.0
    %473 = vmatpush.msra.mxu0 0.0
    %474 = vmatpush.msra.mxu0 0.0
    %475 = vmatpush.msra.mxu0 0.0
    %476 = vmatpush.msra.mxu0 0.0
    %477 = vmatpush.msra.mxu0 0.0
    %478 = vmatpush.msra.mxu0 0.0
    %479 = vmatpush.msra.mxu0 0.0
    %480 = vmatpush.msra.mxu0 0.0
    %481 = vmatpush.msra.mxu0 0.0
    %482 = vmatpush.msra.mxu0 0.0
    %483 = vmatpush.msra.mxu0 0.0
    %484 = vmatpush.msra.mxu0 0.0
    %485 = vmatpush.msra.mxu0 0.0
    %v486 = vand.u32 %v465, 4294901760
    %487 = vmatpush.msra.mxu0 %v486
    %v488 = vand.u32 %v464, 4294901760
    %489 = vmatpush.msra.mxu0 %v488
    %v490 = vand.u32 %v470, 4294901760
    %v491 = vsub.f32 %v470, %v490
    %v492 = vand.u32 %v491, 4294901760
    %v493 = vsub.f32 %v491, %v492
    %v494 = vand.u32 %v493, 4294901760
    %495 = vmatmul.f32.gmra.mxu0 %v494
    %v496 = vpop.f32.mrf.mxu0
    %v497 = vadd.f32 0.0, %v496
    %498 = vdwg.mxu0
    %499 = vmatpush.msra.mxu0 0.0
    %500 = vmatpush.msra.mxu0 0.0
    %501 = vmatpush.msra.mxu0 0.0
    %502 = vmatpush.msra.mxu0 0.0
    %503 = vmatpush.msra.mxu0 0.0
    %504 = vmatpush.msra.mxu0 0.0
    %505 = vmatpush.msra.mxu0 0.0
    %506 = vmatpush.msra.mxu0 0.0
    %507 = vmatpush.msra.mxu0 0.0
    %508 = vmatpush.msra.mxu0 0.0
    %509 = vmatpush.msra.mxu0 0.0
    %510 = vmatpush.msra.mxu0 0.0
    %511 = vmatpush.msra.mxu0 0.0
    %512 = vmatpush.msra.mxu0 0.0
    %v513 = vand.u32 %v465, 4294901760
    %v514 = vsub.f32 %v465, %v513
    %v515 = vand.u32 %v514, 4294901760
    %v516 = vsub.f32 %v514, %v515
    %v517 = vand.u32 %v516, 4294901760
    %518 = vmatpush.msra.mxu0 %v517
    %v519 = vand.u32 %v464, 4294901760
    %v520 = vsub.f32 %v464, %v519
    %v521 = vand.u32 %v520, 4294901760
    %v522 = vsub.f32 %v520, %v521
    %v523 = vand.u32 %v522, 4294901760
    %524 = vmatpush.msra.mxu0 %v523
    %v525 = vand.u32 %v470, 4294901760
    %526 = vmatmul.f32.gmra.mxu0 %v525
    %v527 = vpop.f32.mrf.mxu0
    %v528 = vadd.f32 %v497, %v527
    %529 = vdwg.mxu0
    %530 = vmatpush.msra.mxu0 0.0
    %531 = vmatpush.msra.mxu0 0.0
    %532 = vmatpush.msra.mxu0 0.0
    %533 = vmatpush.msra.mxu0 0.0
    %534 = vmatpush.msra.mxu0 0.0
    %535 = vmatpush.msra.mxu0 0.0
    %536 = vmatpush.msra.mxu0 0.0
    %537 = vmatpush.msra.mxu0 0.0
    %538 = vmatpush.msra.mxu0 0.0
    %539 = vmatpush.msra.mxu0 0.0
    %540 = vmatpush.msra.mxu0 0.0
    %541 = vmatpush.msra.mxu0 0.0
    %542 = vmatpush.msra.mxu0 0.0
    %543 = vmatpush.msra.mxu0 0.0
    %v544 = vand.u32 %v465, 4294901760
    %v545 = vsub.f32 %v465, %v544
    %546 = vmatpush.msra.mxu0 %v545
    %v547 = vand.u32 %v464, 4294901760
    %v548 = vsub.f32 %v464, %v547
    %549 = vmatpush.msra.mxu0 %v548
    %v550 = vand.u32 %v470, 4294901760
    %v551 = vsub.f32 %v470, %v550
    %552 = vmatmul.f32.gmra.mxu0 %v551
    %v553 = vpop.f32.mrf.mxu0
    %v554 = vadd.f32 %v528, %v553
    %555 = vdwg.mxu0
    %556 = vmatpush.msra.mxu0 0.0
    %557 = vmatpush.msra.mxu0 0.0
    %558 = vmatpush.msra.mxu0 0.0
    %559 = vmatpush.msra.mxu0 0.0
    %560 = vmatpush.msra.mxu0 0.0
    %561 = vmatpush.msra.mxu0 0.0
    %562 = vmatpush.msra.mxu0 0.0
    %563 = vmatpush.msra.mxu0 0.0
    %564 = vmatpush.msra.mxu0 0.0
    %565 = vmatpush.msra.mxu0 0.0
    %566 = vmatpush.msra.mxu0 0.0
    %567 = vmatpush.msra.mxu0 0.0
    %568 = vmatpush.msra.mxu0 0.0
    %569 = vmatpush.msra.mxu0 0.0
    %v570 = vand.u32 %v465, 4294901760
    %571 = vmatpush.msra.mxu0 %v570
    %v572 = vand.u32 %v464, 4294901760
    %573 = vmatpush.msra.mxu0 %v572
    %v574 = vand.u32 %v470, 4294901760
    %v575 = vsub.f32 %v470, %v574
    %v576 = vand.u32 %v575, 4294901760
    %577 = vmatmul.f32.gmra.mxu0 %v576
    %v578 = vpop.f32.mrf.mxu0
    %v579 = vadd.f32 %v554, %v578
    %580 = vdwg.mxu0
    %581 = vmatpush.msra.mxu0 0.0
    %582 = vmatpush.msra.mxu0 0.0
    %583 = vmatpush.msra.mxu0 0.0
    %584 = vmatpush.msra.mxu0 0.0
    %585 = vmatpush.msra.mxu0 0.0
    %586 = vmatpush.msra.mxu0 0.0
    %587 = vmatpush.msra.mxu0 0.0
    %588 = vmatpush.msra.mxu0 0.0
    %589 = vmatpush.msra.mxu0 0.0
    %590 = vmatpush.msra.mxu0 0.0
    %591 = vmatpush.msra.mxu0 0.0
    %592 = vmatpush.msra.mxu0 0.0
    %593 = vmatpush.msra.mxu0 0.0
    %594 = vmatpush.msra.mxu0 0.0
    %v595 = vand.u32 %v465, 4294901760
    %v596 = vsub.f32 %v465, %v595
    %v597 = vand.u32 %v596, 4294901760
    %598 = vmatpush.msra.mxu0 %v597
    %v599 = vand.u32 %v464, 4294901760
    %v600 = vsub.f32 %v464, %v599
    %v601 = vand.u32 %v600, 4294901760
    %602 = vmatpush.msra.mxu0 %v601
    %v603 = vand.u32 %v470, 4294901760
    %604 = vmatmul.f32.gmra.mxu0 %v603
    %v605 = vpop.f32.mrf.mxu0
    %v606 = vadd.f32 %v579, %v605
    %607 = vdwg.mxu0
    %608 = vmatpush.msra.mxu0 0.0
    %609 = vmatpush.msra.mxu0 0.0
    %610 = vmatpush.msra.mxu0 0.0
    %611 = vmatpush.msra.mxu0 0.0
    %612 = vmatpush.msra.mxu0 0.0
    %613 = vmatpush.msra.mxu0 0.0
    %614 = vmatpush.msra.mxu0 0.0
    %615 = vmatpush.msra.mxu0 0.0
    %616 = vmatpush.msra.mxu0 0.0
    %617 = vmatpush.msra.mxu0 0.0
    %618 = vmatpush.msra.mxu0 0.0
    %619 = vmatpush.msra.mxu0 0.0
    %620 = vmatpush.msra.mxu0 0.0
    %621 = vmatpush.msra.mxu0 0.0
    %v622 = vand.u32 %v465, 4294901760
    %623 = vmatpush.msra.mxu0 %v622
    %v624 = vand.u32 %v464, 4294901760
    %625 = vmatpush.msra.mxu0 %v624
    %v626 = vand.u32 %v470, 4294901760
    %627 = vmatmul.f32.gmra.mxu0 %v626
    %v628 = vpop.f32.mrf.mxu0
    %v629 = vadd.f32 %v606, %v628
    %630 = vdwg.mxu0
    %631 = vmatpush.msra.mxu0 0.0
    %632 = vmatpush.msra.mxu0 0.0
    %633 = vmatpush.msra.mxu0 0.0
    %634 = vmatpush.msra.mxu0 0.0
    %635 = vmatpush.msra.mxu0 0.0
    %636 = vmatpush.msra.mxu0 0.0
    %637 = vmatpush.msra.mxu0 0.0
    %638 = vmatpush.msra.mxu0 0.0
    %639 = vmatpush.msra.mxu0 0.0
    %640 = vmatpush.msra.mxu0 0.0
    %641 = vmatpush.msra.mxu0 0.0
    %642 = vmatpush.msra.mxu0 0.0
    %643 = vmatpush.msra.mxu0 0.0
    %644 = vmatpush.msra.mxu0 0.0
    %v645 = vand.u32 %v467, 4294901760
    %646 = vmatpush.msra.mxu0 %v645
    %v647 = vand.u32 %v466, 4294901760
    %648 = vmatpush.msra.mxu0 %v647
    %v649 = vand.u32 %v470, 4294901760
    %v650 = vsub.f32 %v470, %v649
    %v651 = vand.u32 %v650, 4294901760
    %v652 = vsub.f32 %v650, %v651
    %v653 = vand.u32 %v652, 4294901760
    %654 = vmatmul.f32.gmra.mxu0 %v653
    %v655 = vpop.f32.mrf.mxu0
    %v656 = vadd.f32 0.0, %v655
    %657 = vdwg.mxu0
    %658 = vmatpush.msra.mxu0 0.0
    %659 = vmatpush.msra.mxu0 0.0
    %660 = vmatpush.msra.mxu0 0.0
    %661 = vmatpush.msra.mxu0 0.0
    %662 = vmatpush.msra.mxu0 0.0
    %663 = vmatpush.msra.mxu0 0.0
    %664 = vmatpush.msra.mxu0 0.0
    %665 = vmatpush.msra.mxu0 0.0
    %666 = vmatpush.msra.mxu0 0.0
    %667 = vmatpush.msra.mxu0 0.0
    %668 = vmatpush.msra.mxu0 0.0
    %669 = vmatpush.msra.mxu0 0.0
    %670 = vmatpush.msra.mxu0 0.0
    %671 = vmatpush.msra.mxu0 0.0
    %v672 = vand.u32 %v467, 4294901760
    %v673 = vsub.f32 %v467, %v672
    %v674 = vand.u32 %v673, 4294901760
    %v675 = vsub.f32 %v673, %v674
    %v676 = vand.u32 %v675, 4294901760
    %677 = vmatpush.msra.mxu0 %v676
    %v678 = vand.u32 %v466, 4294901760
    %v679 = vsub.f32 %v466, %v678
    %v680 = vand.u32 %v679, 4294901760
    %v681 = vsub.f32 %v679, %v680
    %v682 = vand.u32 %v681, 4294901760
    %683 = vmatpush.msra.mxu0 %v682
    %v684 = vand.u32 %v470, 4294901760
    %685 = vmatmul.f32.gmra.mxu0 %v684
    %v686 = vpop.f32.mrf.mxu0
    %v687 = vadd.f32 %v656, %v686
    %688 = vdwg.mxu0
    %689 = vmatpush.msra.mxu0 0.0
    %690 = vmatpush.msra.mxu0 0.0
    %691 = vmatpush.msra.mxu0 0.0
    %692 = vmatpush.msra.mxu0 0.0
    %693 = vmatpush.msra.mxu0 0.0
    %694 = vmatpush.msra.mxu0 0.0
    %695 = vmatpush.msra.mxu0 0.0
    %696 = vmatpush.msra.mxu0 0.0
    %697 = vmatpush.msra.mxu0 0.0
    %698 = vmatpush.msra.mxu0 0.0
    %699 = vmatpush.msra.mxu0 0.0
    %700 = vmatpush.msra.mxu0 0.0
    %701 = vmatpush.msra.mxu0 0.0
    %702 = vmatpush.msra.mxu0 0.0
    %v703 = vand.u32 %v467, 4294901760
    %v704 = vsub.f32 %v467, %v703
    %705 = vmatpush.msra.mxu0 %v704
    %v706 = vand.u32 %v466, 4294901760
    %v707 = vsub.f32 %v466, %v706
    %708 = vmatpush.msra.mxu0 %v707
    %v709 = vand.u32 %v470, 4294901760
    %v710 = vsub.f32 %v470, %v709
    %711 = vmatmul.f32.gmra.mxu0 %v710
    %v712 = vpop.f32.mrf.mxu0
    %v713 = vadd.f32 %v687, %v712
    %714 = vdwg.mxu0
    %715 = vmatpush.msra.mxu0 0.0
    %716 = vmatpush.msra.mxu0 0.0
    %717 = vmatpush.msra.mxu0 0.0
    %718 = vmatpush.msra.mxu0 0.0
    %719 = vmatpush.msra.mxu0 0.0
    %720 = vmatpush.msra.mxu0 0.0
    %721 = vmatpush.msra.mxu0 0.0
    %722 = vmatpush.msra.mxu0 0.0
    %723 = vmatpush.msra.mxu0 0.0
    %724 = vmatpush.msra.mxu0 0.0
    %725 = vmatpush.msra.mxu0 0.0
    %726 = vmatpush.msra.mxu0 0.0
    %727 = vmatpush.msra.mxu0 0.0
    %728 = vmatpush.msra.mxu0 0.0
    %v729 = vand.u32 %v467, 4294901760
    %730 = vmatpush.msra.mxu0 %v729
    %v731 = vand.u32 %v466, 4294901760
    %732 = vmatpush.msra.mxu0 %v731
    %v733 = vand.u32 %v470, 4294901760
    %v734 = vsub.f32 %v470, %v733
    %v735 = vand.u32 %v734, 4294901760
    %736 = vmatmul.f32.gmra.mxu0 %v735
    %v737 = vpop.f32.mrf.mxu0
    %v738 = vadd.f32 %v713, %v737
    %739 = vdwg.mxu0
    %740 = vmatpush.msra.mxu0 0.0
    %741 = vmatpush.msra.mxu0 0.0
    %742 = vmatpush.msra.mxu0 0.0
    %743 = vmatpush.msra.mxu0 0.0
    %744 = vmatpush.msra.mxu0 0.0
    %745 = vmatpush.msra.mxu0 0.0
    %746 = vmatpush.msra.mxu0 0.0
    %747 = vmatpush.msra.mxu0 0.0
    %748 = vmatpush.msra.mxu0 0.0
    %749 = vmatpush.msra.mxu0 0.0
    %750 = vmatpush.msra.mxu0 0.0
    %751 = vmatpush.msra.mxu0 0.0
    %752 = vmatpush.msra.mxu0 0.0
    %753 = vmatpush.msra.mxu0 0.0
    %v754 = vand.u32 %v467, 4294901760
    %v755 = vsub.f32 %v467, %v754
    %v756 = vand.u32 %v755, 4294901760
    %757 = vmatpush.msra.mxu0 %v756
    %v758 = vand.u32 %v466, 4294901760
    %v759 = vsub.f32 %v466, %v758
    %v760 = vand.u32 %v759, 4294901760
    %761 = vmatpush.msra.mxu0 %v760
    %v762 = vand.u32 %v470, 4294901760
    %763 = vmatmul.f32.gmra.mxu0 %v762
    %v764 = vpop.f32.mrf.mxu0
    %v765 = vadd.f32 %v738, %v764
    %766 = vdwg.mxu0
    %767 = vmatpush.msra.mxu0 0.0
    %768 = vmatpush.msra.mxu0 0.0
    %769 = vmatpush.msra.mxu0 0.0
    %770 = vmatpush.msra.mxu0 0.0
    %771 = vmatpush.msra.mxu0 0.0
    %772 = vmatpush.msra.mxu0 0.0
    %773 = vmatpush.msra.mxu0 0.0
    %774 = vmatpush.msra.mxu0 0.0
    %775 = vmatpush.msra.mxu0 0.0
    %776 = vmatpush.msra.mxu0 0.0
    %777 = vmatpush.msra.mxu0 0.0
    %778 = vmatpush.msra.mxu0 0.0
    %779 = vmatpush.msra.mxu0 0.0
    %780 = vmatpush.msra.mxu0 0.0
    %v781 = vand.u32 %v467, 4294901760
    %782 = vmatpush.msra.mxu0 %v781
    %v783 = vand.u32 %v466, 4294901760
    %784 = vmatpush.msra.mxu0 %v783
    %v785 = vand.u32 %v470, 4294901760
    %786 = vmatmul.f32.gmra.mxu0 %v785
    %v787 = vpop.f32.mrf.mxu0
    %v788 = vadd.f32 %v765, %v787
    %789 = vdwg.mxu0
    %vm790 = vcmask 57344
    %791 = vst.msk [vmem:[#allocation2] sm:$0x1] %vm790, %v345
    %v792 = vld [vmem:[#allocation3] sm:$0x1]
    %v793 = vmul.f32 %v348, %v792
    %v794 = vadd.f32 %v793, %v442
    %795 = vst.msk [vmem:[#allocation3] sm:$0x1] %vm790, %v794
    %v796 = vld [vmem:[#allocation4] sm:$0x1]
    %v797 = vmul.f32 %v348, %v796
    %v798 = vadd.f32 %v797, %v463
    %799 = vst.msk [vmem:[#allocation4] sm:$0x1] %vm790, %v798
    %v800 = vld [vmem:[#allocation5] sm:$0xff]
    %v801 = vmul.f32 %v358, %v800
    %v802 = vadd.f32 %v801, %v629
    %803 = vst.msk [vmem:[#allocation5] sm:$0xff] %vm68, %v802
    %v804 = vld [vmem:[#allocation6] sm:$0xff]
    %v805 = vmul.f32 %v358, %v804
    %v806 = vadd.f32 %v805, %v788
    %807 = vst.msk [vmem:[#allocation6] sm:$0xff] %vm68, %v806
    // Predicated region
    $region30: #{ain_forward.2} parent=1 // pred_check
      %p808 = pneg %p35
    $region31: #{ain_forward.2} parent=1 // pred_check_branch
      %810 = sbr.rel (%p808) target = $region33
    $region32: #{ain_forward.2} parent=1 // pred_region
      %v811 = vld [vmem:[#allocation3] sm:$0x1]
      %vm812 = vcmp.gt.f32.partialorder %v811, 0.0
      %v813 = vrcp.pop %v811
      %v814 = vmul.f32 %v811, %v813
      %v815 = vsub.f32 1.0, %v814
      %v816 = vmul.f32 %v813, %v815
      %v817 = vadd.f32 %v813, %v816
      %vm818 = vweird.f32 %v811
      %vm819 = vweird.f32 %v813
      %vm820 = vmor %vm818, %vm819
      %v821 = vsel %vm820, %v813, %v817
      %v822 = vand.u32 2147483647, %v811
      %vm823 = vcmp.eq.f32.partialorder %v822, 8.507059e+37
      %v824 = vand.u32 %v811, 2147483648
      %v825 = vor.u32 1.1754944e-38, %v824
      %v826 = vsel %vm823, %v825, %v821
      %v827 = vmul.f32 1.0, %v826
      %v828 = vsel %vm812, %v827, 0.0
      %v830 = vperm.slane %v828, 0
      %v832 = vmul.f32 %v351, %v830
      %v833 = vsel %vm334, %v832, 0.0
      %834 = vadd.xlane.f32.xlu0 %v833
      %v835 = vpop.xlane.xlu0 %834
      %v836 = vld [vmem:[#allocation4] sm:$0x1]
      %v837 = vmul.f32 %v836, %v828
      %v838 = vsel %vm790, %v837, 0.0
      %839 = vadd.xlane.f32.xlu0 %v838
      %v840 = vpop.xlane.xlu0 %839
      %v841 = vrot.slane %v840, 4
      %v842 = vadd.f32 %v840, %v841
      %v843 = vrot.slane %v842, 2
      %v844 = vadd.f32 %v842, %v843
      %v845 = vrot.slane %v844, 1
      %v846 = vadd.f32 %v844, %v845
      %s847 = vtos %v846
      %v848 = vstv %s847
      %v849 = vrcp.pop %v848
      %v850 = vmul.f32 %v848, %v849
      %v851 = vsub.f32 1.0, %v850
      %v852 = vmul.f32 %v849, %v851
      %v853 = vadd.f32 %v849, %v852
      %vm854 = vweird.f32 %v848
      %vm855 = vweird.f32 %v849
      %vm856 = vmor %vm854, %vm855
      %v857 = vsel %vm856, %v849, %v853
      %v858 = vand.u32 2147483647, %v848
      %vm859 = vcmp.eq.f32.partialorder %v858, 8.507059e+37
      %v860 = vand.u32 %v848, 2147483648
      %v861 = vor.u32 1.1754944e-38, %v860
      %v862 = vsel %vm859, %v861, %v857
      %s863 = vtos %v862
      %v864 = vld [vmem:[#allocation5] sm:$0xff]
      %v865 = vmul.f32 %v864, %v835
      %v866 = vsel %vm68, %v865, 0.0
      %v867 = vrot.slane %v866, 4
      %v868 = vadd.f32 %v866, %v867
      %v869 = vrot.slane %v868, 2
      %v870 = vadd.f32 %v868, %v869
      %v871 = vrot.slane %v870, 1
      %v872 = vadd.f32 %v870, %v871
      %v873 = vld [vmem:[#allocation6] sm:$0xff]
      %v874 = vmul.f32 %v873, %v835
      %v875 = vsel %vm68, %v874, 0.0
      %v876 = vrot.slane %v875, 4
      %v877 = vadd.f32 %v875, %v876
      %v878 = vrot.slane %v877, 2
      %v879 = vadd.f32 %v877, %v878
      %v880 = vrot.slane %v879, 1
      %v881 = vadd.f32 %v879, %v880
      %v882 = vstv %s863
      %v883 = vmul.f32 %v872, %v882
      %v884 = vmul.f32 %v881, %v882
      %v885 = vmul.f32 %v883, %v883
      %v886 = vsub.f32 %v884, %v885
      %v887 = vmax.f32 %v886, 0.0
      %v888 = vrsqrt.pop %v887
      %v889 = vmul.f32 %v888, %v887
      %v890 = vmul.f32 %v889, %v888
      %v891 = vmul.f32 0.5, %v890
      %v892 = vsub.f32 1.5, %v891
      %v893 = vmul.f32 %v888, %v892
      %vm894 = vweird.f32 %v887
      %vm895 = vweird.f32 %v888
      %vm896 = vmor %vm894, %vm895
      %v897 = vsel %vm896, %v888, %v893
      %vm898 = vcmask 253952
      %899 = vst.msk [vmem:[%s5] sm:$0x1] %vm898, %v897
      %v900 = vsub.f32 0.0, %v883
      %v901 = vmul.f32 %v900, %v897
      %902 = vst.msk [vmem:[%s6] sm:$0x1] %vm898, %v901
    $region33: #{ain_forward.2} parent=1 // pred_fallthru
      _
    // Predicated region
    $region34: #{ain_forward.2} parent=1 // pred_check
      _
    $region35: #{ain_forward.2} parent=1 // pred_check_branch
      %904 = sbr.rel (0) target = $region37
    $region36: #{ain_forward.2} parent=1 // pred_region
      _
    $region37: #{ain_forward.2} parent=1 // pred_fallthru
      _
    // Predicated region
    $region38: #{ain_forward.2} parent=1 // pred_check
      _
    $region39: #{ain_forward.2} parent=1 // pred_check_branch
      %906 = sbr.rel (0) target = $region41
    $region40: #{ain_forward.2} parent=1 // pred_region
      _
    $region41: #{ain_forward.2} parent=1 // pred_fallthru
      _
    // Predicated region
    $region42: #{ain_forward.2} parent=1 // pred_check
      _
    $region43: #{ain_forward.2} parent=1 // pred_check_branch
      %908 = sbr.rel (0) target = $region45
    $region44: #{ain_forward.2} parent=1 // pred_region
      _
    $region45: #{ain_forward.2} parent=1 // pred_fallthru
      _
    // Predicated region
    $region46: #{ain_forward.2} parent=1 // pred_check
      _
    $region47: #{ain_forward.2} parent=1 // pred_check_branch
      %910 = sbr.rel (0) target = $region49
    $region48: #{ain_forward.2} parent=1 // pred_region
      _
    $region49: #{ain_forward.2} parent=1 // pred_fallthru
      _
    %911 = vsyncpa [#allocation8], 1

</llo_original>
